<compile_context>
chip_gen: v5e
topology: v5e:2x2
jax: 0.10.0
libtpu: 0.0.40
codegen_flags: <defaults>
</compile_context>

<pallas_src>
import jax
import jax.numpy as jnp
from jax.experimental import pallas as pl
from jax.experimental.pallas import tpu as pltpu


def _round_up(x, m):
    return (x + m - 1) // m * m


def _pad2d(a, rows, cols):
    r, c = a.shape
    if r == rows and c == cols:
        return a
    return jnp.pad(a, ((0, rows - r), (0, cols - c)))


def _linear_kernel(x_ref, w_ref, b_ref, o_ref, acc_ref):
    k = pl.program_id(2)

    @pl.when(k == 0)
    def _():
        acc_ref[...] = jnp.zeros_like(acc_ref)

    # Hot loop: pure MXU matmul + f32 accumulate.
    acc_ref[...] += jnp.dot(
        x_ref[...], w_ref[...], preferred_element_type=jnp.float32
    )

    # Bias add + downcast + store exactly once, on the last K step.
    @pl.when(k == pl.num_programs(2) - 1)
    def _():
        o_ref[...] = (acc_ref[...] + b_ref[...]).astype(o_ref.dtype)


def linear_forward(x, w_t, bias, *, tm=256, tn=256, tk=512):
    """y = x @ w_t + bias.

    x:    (B, in_dim)
    w_t:  (in_dim, out_dim)   -- weight already transposed (store it this way)
    bias: (out_dim,)
    returns (B, out_dim)
    """
    B, in_dim = x.shape
    out_dim = w_t.shape[1]

    # Padded problem sizes: sublane-aligned M, lane-aligned N/K.
    Mp = _round_up(B, 8)
    Np = _round_up(out_dim, 128)
    Kp = _round_up(in_dim, 128)

    # Clamp tiles to the problem, then re-round the padded dims to the tiles.
    tm = min(tm, Mp)
    tn = min(tn, Np)
    tk = min(tk, Kp)
    Mp = _round_up(Mp, tm)
    Np = _round_up(Np, tn)
    Kp = _round_up(Kp, tk)

    x_p = _pad2d(x, Mp, Kp)
    w_p = _pad2d(w_t, Kp, Np)
    b_p = _pad2d(bias.reshape(1, out_dim), 1, Np)

    grid = (Mp // tm, Np // tn, Kp // tk)

    cost = pl.CostEstimate(
        flops=2 * B * in_dim * out_dim,
        transcendentals=0,
        bytes_accessed=(x.size + w_t.size + bias.size + B * out_dim)
        * x.dtype.itemsize,
    )

    y_p = pl.pallas_call(
        _linear_kernel,
        out_shape=jax.ShapeDtypeStruct((Mp, Np), x.dtype),
        grid_spec=pltpu.PrefetchScalarGridSpec(
            num_scalar_prefetch=0,
            grid=grid,
            in_specs=[
                pl.BlockSpec((tm, tk), lambda i, j, k: (i, k)),
                pl.BlockSpec((tk, tn), lambda i, j, k: (k, j)),
                pl.BlockSpec((1, tn), lambda i, j, k: (0, j)),
            ],
            out_specs=pl.BlockSpec((tm, tn), lambda i, j, k: (i, j)),
            scratch_shapes=[pltpu.VMEM((tm, tn), jnp.float32)],
        ),
        compiler_params=pltpu.CompilerParams(
            dimension_semantics=("parallel", "parallel", "arbitrary"),
        ),
        cost_estimate=cost,
    )(x_p, w_p, b_p)

    # Strip padding (plain-JAX glue).
    return y_p[:B, :out_dim]


def mlp_forward(x, weight, bias, **tiles):
    """nn.Linear-convention wrapper: weight is (out_dim, in_dim).

    The transpose here is one-time glue; keep weights stored as
    (in_dim, out_dim) in a real model and call linear_forward directly.
    """
    return linear_forward(x, weight.T, bias, **tiles)


if __name__ == "__main__":
    # Small shapes consistent with the module's forward (a plain linear layer).
    B, in_dim, out_dim = 8, 32, 16

    key = jax.random.PRNGKey(0)
    kx, kw, kb = jax.random.split(key, 3)

    # Deterministic init mimicking nn.Linear's U(-1/sqrt(in_dim), 1/sqrt(in_dim)).
    bound = 1.0 / (in_dim ** 0.5)
    weight = jax.random.uniform(kw, (out_dim, in_dim), jnp.float32, -bound, bound)
    bias = jax.random.uniform(kb, (out_dim,), jnp.float32, -bound, bound)
    x = jax.random.normal(kx, (B, in_dim), jnp.float32)

    # Pre-transpose once, outside the hot path.
    w_t = weight.T

    y = linear_forward(x, w_t, bias)
    jax.block_until_ready(y)

    # Reference check against plain JAX (same math as torch's nn.Linear).
    y_ref = x @ weight.T + bias
    assert y.shape == (B, out_dim)
    assert jnp.allclose(y, y_ref, atol=1e-5, rtol=1e-5)

    print("KERNEL_OK")
</pallas_src>

<mosaic_0001>
module attributes {stable_mosaic.version = 11 : i64} {
  func.func @_linear_kernel(%arg0: i32, %arg1: i32, %arg2: i32, %arg3: memref<8x128xf32, #tpu.memory_space<vmem>>, %arg4: memref<128x128xf32, #tpu.memory_space<vmem>>, %arg5: memref<1x128xf32, #tpu.memory_space<vmem>>, %arg6: memref<8x128xf32, #tpu.memory_space<vmem>>, %arg7: memref<8x128xf32, #tpu.memory_space<vmem>>) attributes {dimension_semantics = [#tpu.dimension_semantics<parallel>, #tpu.dimension_semantics<parallel>, #tpu.dimension_semantics<arbitrary>], iteration_bounds = array<i64: 1, 1, 1>, scalar_prefetch = 0 : i64, scratch_operands = 1 : i64, tpu.core_type = #tpu.core_type<tc>, window_params = [{transform_indices = @transform_0, window_bounds = array<i64: 8, 128>}, {transform_indices = @transform_1, window_bounds = array<i64: 128, 128>}, {transform_indices = @transform_2, window_bounds = array<i64: 1, 128>}, {transform_indices = @transform_3, window_bounds = array<i64: 8, 128>}]} {
    %c0_i32 = arith.constant 0 : i32
    %0 = arith.cmpi eq, %arg2, %c0_i32 : i32
    %1 = arith.extui %0 : i1 to i32
    %c0_i32_0 = arith.constant 0 : i32
    %2 = arith.cmpi ne, %1, %c0_i32_0 : i32
    scf.if %2 {
      %cst_10 = arith.constant 0.000000e+00 : f32
      %12 = vector.broadcast %cst_10 : f32 to vector<8x128xf32>
      %c0_11 = arith.constant 0 : index
      %c0_12 = arith.constant 0 : index
      %13 = vector.load %arg7[%c0_11, %c0_12] : memref<8x128xf32, #tpu.memory_space<vmem>>, vector<8x128xf32>
      tpu.vector_store %arg7[%c0_11, %c0_12], %12 {strides = array<i32>} : memref<8x128xf32, #tpu.memory_space<vmem>>, vector<8x128xf32>,
    } else {
    }
    %c0 = arith.constant 0 : index
    %c0_1 = arith.constant 0 : index
    %3 = vector.load %arg7[%c0, %c0_1] : memref<8x128xf32, #tpu.memory_space<vmem>>, vector<8x128xf32>
    %c0_2 = arith.constant 0 : index
    %c0_3 = arith.constant 0 : index
    %4 = vector.load %arg3[%c0_2, %c0_3] : memref<8x128xf32, #tpu.memory_space<vmem>>, vector<8x128xf32>
    %c0_4 = arith.constant 0 : index
    %c0_5 = arith.constant 0 : index
    %5 = vector.load %arg4[%c0_4, %c0_5] : memref<128x128xf32, #tpu.memory_space<vmem>>, vector<128x128xf32>
    %cst = arith.constant dense<0.000000e+00> : vector<8x128xf32>
    %6 = tpu.matmul %4, %5, %cst {dimension_numbers = #tpu.dot_dimension_numbers<[1], [0], [0], [1], [0, 0, 1, 1], [], []>} : vector<8x128xf32>, vector<128x128xf32>, vector<8x128xf32> -> vector<8x128xf32>
    %7 = arith.addf %3, %6 : vector<8x128xf32>
    %c0_6 = arith.constant 0 : index
    %c0_7 = arith.constant 0 : index
    %8 = vector.load %arg7[%c0_6, %c0_7] : memref<8x128xf32, #tpu.memory_space<vmem>>, vector<8x128xf32>
    tpu.vector_store %arg7[%c0_6, %c0_7], %7 {strides = array<i32>} : memref<8x128xf32, #tpu.memory_space<vmem>>, vector<8x128xf32>,
    %c0_i32_8 = arith.constant 0 : i32
    %9 = arith.cmpi eq, %arg2, %c0_i32_8 : i32
    %10 = arith.extui %9 : i1 to i32
    %c0_i32_9 = arith.constant 0 : i32
    %11 = arith.cmpi ne, %10, %c0_i32_9 : i32
    scf.if %11 {
      %c0_10 = arith.constant 0 : index
      %c0_11 = arith.constant 0 : index
      %12 = vector.load %arg7[%c0_10, %c0_11] : memref<8x128xf32, #tpu.memory_space<vmem>>, vector<8x128xf32>
      %c0_12 = arith.constant 0 : index
      %c0_13 = arith.constant 0 : index
      %13 = vector.load %arg5[%c0_12, %c0_13] : memref<1x128xf32, #tpu.memory_space<vmem>>, vector<1x128xf32>
      %14 = vector.broadcast %13 : vector<1x128xf32> to vector<8x128xf32>
      %15 = arith.addf %12, %14 : vector<8x128xf32>
      %c0_14 = arith.constant 0 : index
      %c0_15 = arith.constant 0 : index
      %16 = vector.load %arg6[%c0_14, %c0_15] : memref<8x128xf32, #tpu.memory_space<vmem>>, vector<8x128xf32>
      tpu.vector_store %arg6[%c0_14, %c0_15], %15 {strides = array<i32>} : memref<8x128xf32, #tpu.memory_space<vmem>>, vector<8x128xf32>,
    } else {
    }
    return
  }
  func.func @transform_0(%arg0: i32, %arg1: i32, %arg2: i32) -> (i32, i32) {
    %c0_i32 = arith.constant 0 : i32
    return %arg0, %arg2 : i32, i32
  }
  func.func @transform_1(%arg0: i32, %arg1: i32, %arg2: i32) -> (i32, i32) {
    %c0_i32 = arith.constant 0 : i32
    return %arg2, %arg1 : i32, i32
  }
  func.func @transform_2(%arg0: i32, %arg1: i32, %arg2: i32) -> (i32, i32) {
    %c0_i32 = arith.constant 0 : i32
    %c0_i32_0 = arith.constant 0 : i32
    return %c0_i32, %arg1 : i32, i32
  }
  func.func @transform_3(%arg0: i32, %arg1: i32, %arg2: i32) -> (i32, i32) {
    %c0_i32 = arith.constant 0 : i32
    return %arg0, %arg1 : i32, i32
  }
}

</mosaic_0001>

<llo_original>
// kernel: tpu_custom_call.1
$region0: #{tpu_custom_call.1}
  #allocation0 [shape = 'u32[]', space=smem, size = 0x4, offset = 0x4, fixed_abs, tag = 'smem constant byte address 0x4 - core index']
  #allocation1 [shape = 'u32[72,128]{1,0:T(1,128)}', space=vmem, size = 0x9000, scoped, tag = 'internal scratch']
  #allocation2 [shape = 'f32[8,128]{1,0:T(8,128)}', space=vmem, size = 0x1000, scoped, tag = 'scratch operand']
  %s0 = inlined_call_operand.hbm [shape: f32[8,128], index: 0, kind: input, shape index: {}]
  %s1 = inlined_call_operand.hbm [shape: f32[128,128], index: 1, kind: input, shape index: {}]
  %s2 = inlined_call_operand.vmem [shape: f32[1,128], index: 2, kind: input, shape index: {}]
  %s3 = inlined_call_operand.hbm [shape: f32[8,128], index: 3, kind: output, shape index: {}]
  %s4 = sld [smem:[#allocation0]]
  $region38: #{tpu_custom_call.1} parent=0
    _
  %s6 = ssub.s32 1, %s4
  %s7 = scalar_select 0, %s6, %s4
  $region1: #{tpu_custom_call.1} parent=0
    #allocation3 [shape = 'u8[4096]{0}', space=vmem, size = 0x1000, scoped, tag = 'input window, operand 0, single buffered']
    #allocation4 [shape = 's32[1]{0}', space=sflag, size = 0x4, scoped, tag = 'scoped memory for tpu_custom_call.1']
    #allocation5 [shape = 's32[1]{0}', space=sflag, size = 0x4, scoped, tag = 'scoped memory for tpu_custom_call.1']
    #allocation6 [shape = 'u8[65536]{0}', space=vmem, size = 0x10000, scoped, tag = 'input window, operand 1, single buffered']
    #allocation7 [shape = 's32[1]{0}', space=sflag, size = 0x4, scoped, tag = 'scoped memory for tpu_custom_call.1']
    #allocation8 [shape = 'u8[4096]{0}', space=vmem, size = 0x1000, scoped, tag = 'output window, operand 0, single buffered']
    %8 = vsyncpa [#allocation4], 0
    %9 = vsyncpa [#allocation7], 0
    %10 = vsyncpa [#allocation5], 0
    // Predicated region
    $region2: #{tpu_custom_call.1} parent=1 // pred_check
      _
    $region3: #{tpu_custom_call.1} parent=1 // pred_check_branch
      %12 = sbr.rel (0) target = $region5
    $region4: #{tpu_custom_call.1} parent=1 // pred_region
      %14 = vsyncadd [#allocation4], 0
      %s16 = sshll.u32 %s0, 4
      %s17 = int_to_ptr.hbm [resolvable:$true] %s16
      %s18 = sshll.u32 [#allocation3], 4
      %s19 = int_to_ptr.vmem [resolvable:$true] %s18
      %21 = dma.hbm_to_vmem [thread:$0]  %s17, 128, %s19, [#allocation4]
    $region5: #{tpu_custom_call.1} parent=1 // pred_fallthru
      _
    // Predicated region
    $region6: #{tpu_custom_call.1} parent=1 // pred_check
      _
    $region7: #{tpu_custom_call.1} parent=1 // pred_check_branch
      %23 = sbr.rel (0) target = $region9
    $region8: #{tpu_custom_call.1} parent=1 // pred_region
      %25 = vsyncadd [#allocation7], 0
      %s26 = sshll.u32 %s1, 4
      %s27 = int_to_ptr.hbm [resolvable:$true] %s26
      %s28 = sshll.u32 [#allocation6], 4
      %s29 = int_to_ptr.vmem [resolvable:$true] %s28
      %34 = dma.hbm_to_vmem [thread:$0]  %s27, 2048, %s29, [#allocation7], 128, 128, 8
    $region9: #{tpu_custom_call.1} parent=1 // pred_fallthru
      _
    // Predicated region
    $region10: #{tpu_custom_call.1} parent=1 // pred_check
      _
    $region11: #{tpu_custom_call.1} parent=1 // pred_check_branch
      %36 = sbr.rel (0) target = $region13
    $region12: #{tpu_custom_call.1} parent=1 // pred_region
      _
    $region13: #{tpu_custom_call.1} parent=1 // pred_fallthru
      _
    // Predicated region
    $region14: #{tpu_custom_call.1} parent=1 // pred_check
      _
    $region15: #{tpu_custom_call.1} parent=1 // pred_check_branch
      %38 = sbr.rel (0) target = $region17
    $region16: #{tpu_custom_call.1} parent=1 // pred_region
      %40 = dma.done [#allocation4], 128
    $region17: #{tpu_custom_call.1} parent=1 // pred_fallthru
      _
    // Predicated region
    $region18: #{tpu_custom_call.1} parent=1 // pred_check
      _
    $region19: #{tpu_custom_call.1} parent=1 // pred_check_branch
      %42 = sbr.rel (0) target = $region21
    $region20: #{tpu_custom_call.1} parent=1 // pred_region
      %44 = dma.done [#allocation7], 2048
    $region21: #{tpu_custom_call.1} parent=1 // pred_fallthru
      _
    %p45 = scmp.eq.s32.totalorder 0, 0
    // Predicated region
    $region22: #{tpu_custom_call.1} parent=1 // pred_check
      %p46 = pneg %p45
    $region23: #{tpu_custom_call.1} parent=1 // pred_check_branch
      %48 = sbr.rel (%p46) target = $region25
    $region24: #{tpu_custom_call.1} parent=1 // pred_region
      %49 = vst [vmem:[#allocation2] sm:$0xff] 0.0
    $region25: #{tpu_custom_call.1} parent=1 // pred_fallthru
      _
    %v50 = vld [vmem:[#allocation2] sm:$0xff]
    %v51 = vld [vmem:[#allocation3] sm:$0xff]
    %v52 = vld [vmem:[#allocation6] sm:$0xff]
    %v53 = vld [vmem:[#allocation6 + $0x8] sm:$0xff]
    %v54 = vld [vmem:[#allocation6 + $0x10] sm:$0xff]
    %v55 = vld [vmem:[#allocation6 + $0x18] sm:$0xff]
    %v56 = vld [vmem:[#allocation6 + $0x20] sm:$0xff]
    %v57 = vld [vmem:[#allocation6 + $0x28] sm:$0xff]
    %v58 = vld [vmem:[#allocation6 + $0x30] sm:$0xff]
    %v59 = vld [vmem:[#allocation6 + $0x38] sm:$0xff]
    %v60 = vld [vmem:[#allocation6 + $0x40] sm:$0xff]
    %v61 = vld [vmem:[#allocation6 + $0x48] sm:$0xff]
    %v62 = vld [vmem:[#allocation6 + $0x50] sm:$0xff]
    %v63 = vld [vmem:[#allocation6 + $0x58] sm:$0xff]
    %v64 = vld [vmem:[#allocation6 + $0x60] sm:$0xff]
    %v65 = vld [vmem:[#allocation6 + $0x68] sm:$0xff]
    %v66 = vld [vmem:[#allocation6 + $0x70] sm:$0xff]
    %v67 = vld [vmem:[#allocation6 + $0x78] sm:$0xff]
    %68 = vmatpush.msra.mxu0 %v67
    %69 = vmatpush.msra.mxu0 %v66
    %70 = vmatpush.msra.mxu0 %v65
    %71 = vmatpush.msra.mxu0 %v64
    %72 = vmatpush.msra.mxu0 %v63
    %73 = vmatpush.msra.mxu0 %v62
    %74 = vmatpush.msra.mxu0 %v61
    %75 = vmatpush.msra.mxu0 %v60
    %76 = vmatpush.msra.mxu0 %v59
    %77 = vmatpush.msra.mxu0 %v58
    %78 = vmatpush.msra.mxu0 %v57
    %79 = vmatpush.msra.mxu0 %v56
    %80 = vmatpush.msra.mxu0 %v55
    %81 = vmatpush.msra.mxu0 %v54
    %82 = vmatpush.msra.mxu0 %v53
    %83 = vmatpush.msra.mxu0 %v52
    %84 = vmatmul.f32.gmra.mxu0 %v51
    %v85 = vpop.f32.mrf.mxu0
    %v86 = vadd.f32 0.0, %v85
    %87 = vdwg.mxu0
    %v88 = vadd.f32 %v50, %v86
    %89 = vst [vmem:[#allocation2] sm:$0xff] %v88
    // Predicated region
    $region26: #{tpu_custom_call.1} parent=1 // pred_check
      %p90 = pneg %p45
    $region27: #{tpu_custom_call.1} parent=1 // pred_check_branch
      %92 = sbr.rel (%p90) target = $region29
    $region28: #{tpu_custom_call.1} parent=1 // pred_region
      %v93 = vld [vmem:[#allocation2] sm:$0xff]
      %v94 = vld [vmem:[%s2] sm:$0x1]
      %v96 = vperm.slane %v94, 0
      %v98 = vadd.f32 %v93, %v96
      %99 = vst [vmem:[#allocation8] sm:$0xff] %v98
    $region29: #{tpu_custom_call.1} parent=1 // pred_fallthru
      _
    // Predicated region
    $region30: #{tpu_custom_call.1} parent=1 // pred_check
      _
    $region31: #{tpu_custom_call.1} parent=1 // pred_check_branch
      %101 = sbr.rel (0) target = $region33
    $region32: #{tpu_custom_call.1} parent=1 // pred_region
      %103 = vsyncadd [#allocation5], 0
      %s105 = sshll.u32 [#allocation8], 4
      %s106 = int_to_ptr.vmem [resolvable:$true] %s105
      %s107 = sshll.u32 %s3, 4
      %s108 = int_to_ptr.hbm [resolvable:$true] %s107
      %110 = dma.vmem_to_hbm [thread:$0]  %s106, 128, %s108, [#allocation5]
    $region33: #{tpu_custom_call.1} parent=1 // pred_fallthru
      _
    // Predicated region
    $region34: #{tpu_custom_call.1} parent=1 // pred_check
      _
    $region35: #{tpu_custom_call.1} parent=1 // pred_check_branch
      %112 = sbr.rel (0) target = $region37
    $region36: #{tpu_custom_call.1} parent=1 // pred_region
      %114 = dma.done [#allocation5], 128
    $region37: #{tpu_custom_call.1} parent=1 // pred_fallthru
      _
    %115 = vsyncpa [#allocation4], 1
    %116 = vsyncpa [#allocation7], 1
    %117 = vsyncpa [#allocation5], 1

</llo_original>
